<compile_context>
chip_gen: v7x
topology: tpu7x:2x2x1
jax: 0.10.0
libtpu: 0.0.40
codegen_flags: <defaults>
</compile_context>

<pallas_src>
from functools import partial

import numpy as np
import jax
import jax.numpy as jnp
from jax.experimental import pallas as pl
from jax.experimental.pallas import tpu as pltpu


# --------------------------------------------------------------------------
# Basis construction (mirrors GaussianProcess.create_basis / forward rebuild)
# --------------------------------------------------------------------------
def gaussian_pdf(x, mu, sigma):
    return np.exp(-0.5 * ((x - mu) / sigma) ** 2) / (sigma * np.sqrt(2.0 * np.pi))


def make_basis(num_timesteps, input_dim, num_basis, stddev, seed=0):
    """Deterministic re-implementation of the module's basis construction
    (same pdf row broadcast over all timesteps)."""
    rng = np.random.RandomState(seed)
    xs = np.linspace(0.0, 1.0, input_dim)
    basis = np.zeros((num_timesteps, input_dim, num_basis), dtype=np.float32)
    for i in range(num_basis):
        mu = rng.rand()
        basis[:, :, i] = gaussian_pdf(xs, mu=mu, sigma=stddev)[None, :]
    return jnp.asarray(basis)


# --------------------------------------------------------------------------
# Pallas kernels
# --------------------------------------------------------------------------
def _gp_kernel_bmajor(x_ref, bw_ref, o_ref):
    # x_ref : (tb, tn)      sublane/lane-dense input tile
    # bw_ref: (O, tn)       precomputed basis @ w.T (batch-independent)
    # o_ref : (tb, O, tn)   batch-major output tile
    x = x_ref[...].astype(jnp.float32)
    bw = bw_ref[...].astype(jnp.float32)
    o_ref[...] = (x[:, None, :] * bw[None, :, :]).astype(o_ref.dtype)


def _gp_kernel_omajor(x_ref, bw_ref, o_ref):
    # x_ref : (tb, tn)
    # bw_ref: (O, tn)
    # o_ref : (O, tb, tn)   O-major output tile: trailing (tb, tn) is fully
    #                       sublane-dense -> unmasked vst (key on v5e)
    x = x_ref[...].astype(jnp.float32)
    bw = bw_ref[...].astype(jnp.float32)
    o_ref[...] = (bw[:, None, :] * x[None, :, :]).astype(o_ref.dtype)


# --------------------------------------------------------------------------
# Tiling heuristics
# --------------------------------------------------------------------------
_TN_CAP = 8192                    # max lane tile (multiple of 128)
_TARGET_OUT_ELEMS = 512 * 1024    # ~2 MiB f32 output tile per grid step
_VMEM_TILE_BUDGET = 6 * 1024 * 1024   # single-buffered per-step bytes
_FAST_PATH_OUT_ELEMS = 64 * 1024
_SPLIT_FOR_MEGACORE_ELEMS = 256 * 1024


def _round_up(v, m):
    return ((v + m - 1) // m) * m


def _cdiv(a, b):
    return -(-a // b)


def _choose_tiles(B, N, O):
    # --- lane (flattened T*D) axis: pad only to 128, then split evenly ------
    n_pad = _round_up(N, 128)
    gl = _cdiv(n_pad, _TN_CAP)
    tn = _round_up(_cdiv(n_pad, gl), 128)

    # --- batch axis: even split; tiles are either the full batch or a ------
    # --- multiple of 8 (keeps the (8,128) block constraint and sublanes) ---
    tb_vmem = max(1, (_VMEM_TILE_BUDGET // 4 - O * tn) // ((O + 1) * tn))
    tb_cap = max(1, min(_TARGET_OUT_ELEMS // max(1, O * tn), tb_vmem))
    if B <= tb_cap:
        tb, gb = B, 1
    else:
        b8 = _round_up(B, 8)
        gb = _cdiv(b8, tb_cap)
        tb = _round_up(_cdiv(b8, gb), 8)

    # --- give both v7x TensorCores balanced work when a single large tile ---
    # --- would otherwise remain (split on the lane axis, not the batch) ----
    if gl * gb == 1 and B * N * O >= _SPLIT_FOR_MEGACORE_ELEMS and n_pad >= 256:
        gl = 2
        tn = _round_up(_cdiv(n_pad, gl), 128)

    return tn, gl, tn * gl, tb, gb, tb * gb


# --------------------------------------------------------------------------
# Forward wrapper
# --------------------------------------------------------------------------
def gp_forward(x, basis, w, *, out_dtype=jnp.float32, native_layout=False,
               force_pallas=False):
    """out[b,t,d,o] = x[b,t,d] * sum_k basis[t,d,k] * w[o,k]

    Returns (B, T, D, O) like the PyTorch module, or the kernel-native
    (B, O, T, D) layout (no transpose copy) when native_layout=True.
    """
    if x.ndim == 2:
        x = x[:, None, :]
    B, T, D = x.shape
    O, K = w.shape
    assert basis.shape == (T, D, K), "basis must be (T, D, K) matching x and w"
    N = T * D

    xf = x.astype(jnp.float32)
    basis_f = basis.astype(jnp.float32)
    w_f = w.astype(jnp.float32)

    # Tiny problems: a fused XLA elementwise op beats any kernel launch.
    if not force_pallas and B * N * O < _FAST_PATH_OUT_ELEMS:
        bw_tdo = jnp.einsum("tdk,ok->tdo", basis_f, w_f)
        out = (xf[..., None] * bw_tdo[None]).astype(out_dtype)
        if native_layout:
            return jnp.transpose(out, (0, 3, 1, 2))
        return out

    # Batch-independent fold of the K-contraction (tiny: O*T*D elements).
    bw = jnp.einsum("tdk,ok->otd", basis_f, w_f).reshape(O, N)

    tn, gl, n_final, tb, gb, b_final = _choose_tiles(B, N, O)

    x_l = xf.reshape(B, N)
    if (b_final, n_final) != (B, N):
        x_l = jnp.pad(x_l, ((0, b_final - B), (0, n_final - N)))
    if n_final != N:
        bw = jnp.pad(bw, ((0, 0), (0, n_final - N)))

    # O-major output -> fully sublane-dense (tb, tn) store tiles, worthwhile
    # only when the batch tile has >= 8 rows.
    omajor = (not native_layout) and tb >= 8

    if omajor:
        out_shape = jax.ShapeDtypeStruct((O, b_final, n_final), out_dtype)
        out_spec = pl.BlockSpec((O, tb, tn), lambda i, b: (0, b, i))
        kernel = _gp_kernel_omajor
    else:
        out_shape = jax.ShapeDtypeStruct((b_final, O, n_final), out_dtype)
        out_spec = pl.BlockSpec((tb, O, tn), lambda i, b: (b, 0, i))
        kernel = _gp_kernel_bmajor

    out_bytes = int(jnp.dtype(out_dtype).itemsize) * B * N * O
    out = pl.pallas_call(
        kernel,
        out_shape=out_shape,
        grid_spec=pltpu.PrefetchScalarGridSpec(
            num_scalar_prefetch=0,
            grid=(gl, gb),            # batch innermost: bw tile not re-DMAed
            in_specs=[
                pl.BlockSpec((tb, tn), lambda i, b: (b, i)),   # x, 2D sublane-dense
                pl.BlockSpec((O, tn), lambda i, b: (0, i)),    # bw, batch-invariant
            ],
            out_specs=out_spec,
        ),
        compiler_params=pltpu.CompilerParams(
            dimension_semantics=("parallel", "parallel")),
        cost_estimate=pl.CostEstimate(
            flops=B * N * O,
            transcendentals=0,
            bytes_accessed=4 * (B * N + O * N) + out_bytes),
    )(x_l, bw)

    padded = (b_final, n_final) != (B, N)

    if native_layout:
        res = out[:B, :, :N] if padded else out            # (B, O, N)
        return res.reshape(B, O, T, D)

    # Single fused slice+transpose copy back to the module's (B, T, D, O)
    # layout; the trailing reshape is a free bitcast.
    if omajor:
        res = out[:, :B, :N] if padded else out            # (O, B, N)
        res = jnp.transpose(res, (1, 2, 0))
    else:
        res = out[:B, :, :N] if padded else out            # (B, O, N)
        res = jnp.transpose(res, (0, 2, 1))
    return res.reshape(B, T, D, O)


# --------------------------------------------------------------------------
# Demo / correctness check
# --------------------------------------------------------------------------
if __name__ == "__main__":
    def reference(x, basis, w):
        # Mirrors the PyTorch forward exactly (in f32).
        return jnp.einsum(
            "btdk,ok->btdo",
            x[..., None].astype(jnp.float32) * basis[None].astype(jnp.float32),
            w.astype(jnp.float32))

    K, O, stddev = 20, 4, 0.5
    cases = [
        (2, 8, 16),    # small batch  -> (B, O, N) kernel layout
        (16, 8, 16),   # batch >= 8   -> sublane-dense (O, B, N) kernel layout
        (3, 7, 18),    # N % 128 != 0 -> padding + fused slice/transpose path
    ]

    fwd = jax.jit(partial(gp_forward, force_pallas=True))   # exercise Pallas path

    key = jax.random.PRNGKey(0)
    for idx, (B, T, D) in enumerate(cases):
        key, kx, kw = jax.random.split(key, 3)
        x = jax.random.normal(kx, (B, T, D), dtype=jnp.float32)
        # Module zero-initializes w; use deterministic non-zero weights here.
        w = 0.1 * jax.random.normal(kw, (O, K), dtype=jnp.float32)
        basis = make_basis(T, D, K, stddev, seed=idx)

        out = jax.block_until_ready(fwd(x, basis, w))
        ref = reference(x, basis, w)
        assert out.shape == (B, T, D, O)
        np.testing.assert_allclose(np.asarray(out), np.asarray(ref),
                                   rtol=1e-5, atol=1e-5)

    # Also sanity-check the tiny-problem XLA fast path once.
    B, T, D = cases[0]
    key, kx, kw = jax.random.split(key, 3)
    x = jax.random.normal(kx, (B, T, D), dtype=jnp.float32)
    w = 0.1 * jax.random.normal(kw, (O, K), dtype=jnp.float32)
    basis = make_basis(T, D, K, stddev, seed=0)
    out_fast = jax.block_until_ready(gp_forward(x, basis, w))
    np.testing.assert_allclose(np.asarray(out_fast),
                               np.asarray(reference(x, basis, w)),
                               rtol=1e-5, atol=1e-5)

    print("KERNEL_OK")
</pallas_src>

<mosaic_0001>
module attributes {stable_mosaic.version = 11 : i64} {
  func.func @_gp_kernel_bmajor(%arg0: i32, %arg1: i32, %arg2: memref<2x128xf32, #tpu.memory_space<vmem>>, %arg3: memref<4x128xf32, #tpu.memory_space<vmem>>, %arg4: memref<2x4x128xf32, #tpu.memory_space<vmem>>) attributes {dimension_semantics = [#tpu.dimension_semantics<parallel>, #tpu.dimension_semantics<parallel>], iteration_bounds = array<i64: 1, 1>, scalar_prefetch = 0 : i64, scratch_operands = 0 : i64, tpu.core_type = #tpu.core_type<tc>, window_params = [{transform_indices = @transform_0, window_bounds = array<i64: 2, 128>}, {transform_indices = @transform_1, window_bounds = array<i64: 4, 128>}, {transform_indices = @transform_2, window_bounds = array<i64: 2, 4, 128>}]} {
    %c0 = arith.constant 0 : index
    %c0_0 = arith.constant 0 : index
    %0 = vector.load %arg2[%c0, %c0_0] : memref<2x128xf32, #tpu.memory_space<vmem>>, vector<2x128xf32>
    %c0_1 = arith.constant 0 : index
    %c0_2 = arith.constant 0 : index
    %1 = vector.load %arg3[%c0_1, %c0_2] : memref<4x128xf32, #tpu.memory_space<vmem>>, vector<4x128xf32>
    %2 = vector.shape_cast %0 : vector<2x128xf32> to vector<2x1x128xf32>
    %3 = vector.shape_cast %1 : vector<4x128xf32> to vector<1x4x128xf32>
    %4 = vector.broadcast %2 : vector<2x1x128xf32> to vector<2x4x128xf32>
    %5 = vector.broadcast %3 : vector<1x4x128xf32> to vector<2x4x128xf32>
    %6 = arith.mulf %4, %5 : vector<2x4x128xf32>
    %c0_3 = arith.constant 0 : index
    %c0_4 = arith.constant 0 : index
    %c0_5 = arith.constant 0 : index
    %7 = vector.load %arg4[%c0_3, %c0_4, %c0_5] : memref<2x4x128xf32, #tpu.memory_space<vmem>>, vector<2x4x128xf32>
    tpu.vector_store %arg4[%c0_3, %c0_4, %c0_5], %6 {strides = array<i32>} : memref<2x4x128xf32, #tpu.memory_space<vmem>>, vector<2x4x128xf32>,
    return
  }
  func.func @transform_0(%arg0: i32, %arg1: i32) -> (i32, i32) {
    %c0_i32 = arith.constant 0 : i32
    return %arg1, %arg0 : i32, i32
  }
  func.func @transform_1(%arg0: i32, %arg1: i32) -> (i32, i32) {
    %c0_i32 = arith.constant 0 : i32
    %c0_i32_0 = arith.constant 0 : i32
    return %c0_i32, %arg0 : i32, i32
  }
  func.func @transform_2(%arg0: i32, %arg1: i32) -> (i32, i32, i32) {
    %c0_i32 = arith.constant 0 : i32
    %c0_i32_0 = arith.constant 0 : i32
    return %arg1, %c0_i32, %arg0 : i32, i32, i32
  }
}

</mosaic_0001>

<llo_original>
// kernel: gp_forward.1
$region0: #{gp_forward.1}
  #allocation0 [shape = 'u32[]', space=smem, size = 0x4, offset = 0x4, fixed_abs, tag = 'smem constant byte address 0x4 - core index']
  #allocation1 [shape = 'u32[144,128]{1,0:T(1,128)}', space=vmem, size = 0x12000, scoped, tag = 'internal scratch']
  %s0 = inlined_call_operand.vmem [shape: f32[2,128], index: 0, kind: input, shape index: {}]
  %s1 = inlined_call_operand.vmem [shape: f32[4,128], index: 1, kind: input, shape index: {}]
  %s2 = inlined_call_operand.vmem [shape: f32[2,4,128], index: 2, kind: output, shape index: {}]
  %s3 = sld [smem:[#allocation0]]
  $region18: #{gp_forward.1} parent=0
    _
  %s5 = ssub.s32 1, %s3
  %s6 = scalar_select 0, %s5, %s3
  // Predicated region
  $region2: #{gp_forward.1} parent=0 // pred_check
    _
  $region3: #{gp_forward.1} parent=0 // pred_check_branch
    %8 = sbr.rel (0) target = $region5
  $region4: #{gp_forward.1} parent=0 // pred_region
    _
  $region5: #{gp_forward.1} parent=0 // pred_fallthru
    _
  // Predicated region
  $region6: #{gp_forward.1} parent=0 // pred_check
    _
  $region7: #{gp_forward.1} parent=0 // pred_check_branch
    %10 = sbr.rel (0) target = $region9
  $region8: #{gp_forward.1} parent=0 // pred_region
    _
  $region9: #{gp_forward.1} parent=0 // pred_fallthru
    _
  %v11 = vld [vmem:[%s0] sm:$0x3]
  %v12 = vld [vmem:[%s1] sm:$0xf]
  %v15 = vunpack.c.l.s4 1966171168
  %v16 = vunpack.c.0.s8 %v15
  %v17 = vlaneseq
  %v18 = vshrl.u32 %v17, 7
  %v19 = vsub.s32 %v16, %v18
  %v20 = vrot.slane %v11, %v19
  %v21 = vcombine.high %v20, %v20
  %v23 = vunpack.c.l.s4 1966171168
  %v24 = vunpack.c.0.s8 %v23
  %v25 = vlaneseq
  %v26 = vshrl.u32 %v25, 7
  %v27 = vsub.s32 %v24, %v26
  %v28 = vrot.slane %v20, %v27
  %v30 = vunpack.c.l.s4 1966171168
  %v31 = vunpack.c.0.s8 %v30
  %v32 = vlaneseq
  %v33 = vshrl.u32 %v32, 7
  %v34 = vsub.s32 %v31, %v33
  %v35 = vrot.slane %v21, %v34
  %v36 = vlaneseq
  %v37 = vshrl.u32 %v36, 7
  %v38 = vsub.s32 0, %v37
  %v39 = vrot.slane %v28, %v38
  %v40 = vlaneseq
  %v41 = vshrl.u32 %v40, 7
  %v42 = vsub.s32 0, %v41
  %v43 = vrot.slane %v35, %v42
  %v46 = vmul.f32 %v39, %v12
  %v47 = vmul.f32 %v43, %v12
  %48 = vst [vmem:[%s2] sm:$0xf] %v46
  %49 = vst [vmem:[%s2 + $0x4] sm:$0xf] %v47
  // Predicated region
  $region10: #{gp_forward.1} parent=0 // pred_check
    _
  $region11: #{gp_forward.1} parent=0 // pred_check_branch
    %51 = sbr.rel (0) target = $region13
  $region12: #{gp_forward.1} parent=0 // pred_region
    _
  $region13: #{gp_forward.1} parent=0 // pred_fallthru
    _
  // Predicated region
  $region14: #{gp_forward.1} parent=0 // pred_check
    _
  $region15: #{gp_forward.1} parent=0 // pred_check_branch
    %53 = sbr.rel (0) target = $region17
  $region16: #{gp_forward.1} parent=0 // pred_region
    _
  $region17: #{gp_forward.1} parent=0 // pred_fallthru
    _

</llo_original>
